<compile_context>
chip_gen: v6e
topology: v6e:2x2x1
jax: 0.10.0
libtpu: 0.0.40
codegen_flags: <defaults>
</compile_context>

<pallas_src>
import jax
import jax.numpy as jnp
from jax.experimental import pallas as pl
from jax.experimental.pallas import tpu as pltpu


def make_basic_block_kernel(N, L, C, K, P, eps):
    """Fused BasicBlock kernel for static shapes (Cin == Cout == C, stride=1)."""
    NL = N * L
    inv_nl = 1.0 / float(NL)

    def elu(v):  # ELU(alpha=1)
        return jnp.where(v > 0, v, jnp.exp(v) - 1.0)

    def kernel(xp_ref, x_ref, w1_ref, w2_ref, g1_ref, b1_ref, g2_ref, b2_ref,
               o_ref, hpad_ref):
        # ---- im2col helper: (K*C, N*L) column matrix, batch folded into lanes --
        # col[t*C + c, n*L + l] = src[n, c, l + t]   (matches tap-major weight flat)
        def im2col(read_tap_slice):
            return jnp.concatenate(
                [jnp.concatenate([read_tap_slice(n, t) for n in range(N)], axis=1)
                 for t in range(K)],
                axis=0)

        # ---- conv1: single MXU dot over all batches ----------------------------
        col1 = im2col(lambda n, t: xp_ref[n, :, t:t + L])            # (K*C, N*L)
        h1 = jnp.dot(w1_ref[...], col1,
                     preferred_element_type=jnp.float32)             # (C, N*L)

        # ---- bn1 (training-mode batch stats over (N, L), biased variance) ------
        mean1 = jnp.sum(h1, axis=1, keepdims=True) * inv_nl          # (C, 1)
        var1 = jnp.sum(h1 * h1, axis=1, keepdims=True) * inv_nl - mean1 * mean1
        scale1 = jax.lax.rsqrt(var1 + eps) * g1_ref[...]             # (C, 1)
        shift1 = b1_ref[...] - mean1 * scale1
        scale1_b = jnp.broadcast_to(scale1, (C, NL))                 # hoisted
        shift1_b = jnp.broadcast_to(shift1, (C, NL))
        a1 = elu(h1 * scale1_b + shift1_b)                           # (C, N*L)

        # ---- stage padded activation for conv2 (zero only the halo lanes) ------
        if P > 0:
            zp = jnp.zeros((C, P), jnp.float32)
            for n in range(N):
                hpad_ref[n, :, :P] = zp
                hpad_ref[n, :, P + L:] = zp
        for n in range(N):
            hpad_ref[n, :, P:P + L] = a1[:, n * L:(n + 1) * L]

        # ---- conv2: same single-dot im2col over the padded staged activation ---
        col2 = im2col(lambda n, t: hpad_ref[n, :, t:t + L])          # (K*C, N*L)
        h2 = jnp.dot(w2_ref[...], col2,
                     preferred_element_type=jnp.float32)             # (C, N*L)

        # ---- bn2 scale/shift ----------------------------------------------------
        mean2 = jnp.sum(h2, axis=1, keepdims=True) * inv_nl
        var2 = jnp.sum(h2 * h2, axis=1, keepdims=True) * inv_nl - mean2 * mean2
        scale2 = jax.lax.rsqrt(var2 + eps) * g2_ref[...]
        shift2 = b2_ref[...] - mean2 * scale2
        scale2_b = jnp.broadcast_to(scale2, (C, L))                  # per-channel,
        shift2_b = jnp.broadcast_to(shift2, (C, L))                  # shared by all n

        # ---- residual add (unpadded x) + final ELU, lane-dense per-batch store --
        for n in range(N):
            y = h2[:, n * L:(n + 1) * L] * scale2_b + shift2_b + x_ref[n]
            o_ref[n] = elu(y)

    return kernel


def basic_block_forward(x_ncl, w1, w2, g1, b1, g2, b2, eps=1e-5):
    """x_ncl: (N, C, L) float32, PyTorch NCL layout.  Returns (N, C, L)."""
    N, Cin, L = x_ncl.shape
    Cout, Cin2, K = w1.shape
    assert Cin == Cin2 == Cout, "identity residual requires Cin == Cout (no downsample)"
    C = Cout
    P = K // 2
    Lp = L + 2 * P

    x = x_ncl.astype(jnp.float32)
    xp = jnp.pad(x, ((0, 0), (0, 0), (P, P)))               # conv padding along L only
    # Flatten weights so rows of the im2col column matrix match (tap-major, channel):
    # W[co, t*C + ci] = w[co, ci, t]
    w1_f = jnp.transpose(w1, (0, 2, 1)).reshape(C, K * C).astype(jnp.float32)
    w2_f = jnp.transpose(w2, (0, 2, 1)).reshape(C, K * C).astype(jnp.float32)
    g1_c = g1.reshape(C, 1).astype(jnp.float32)
    b1_c = b1.reshape(C, 1).astype(jnp.float32)
    g2_c = g2.reshape(C, 1).astype(jnp.float32)
    b2_c = b2.reshape(C, 1).astype(jnp.float32)

    kernel = make_basic_block_kernel(N, L, C, K, P, eps)

    # NOTE: for large N*L this single fused step should be tiled over N
    # ("parallel" for megacore, 2-pass BN reduction) with an explicit
    # vmem_limit_bytes; at this demo size the whole problem is a few KiB.
    out = pl.pallas_call(
        kernel,
        out_shape=jax.ShapeDtypeStruct((N, C, L), jnp.float32),
        grid_spec=pltpu.PrefetchScalarGridSpec(
            num_scalar_prefetch=0,
            grid=(1,),
            in_specs=[
                pl.BlockSpec((N, C, Lp), lambda i: (0, 0, 0)),   # padded x (conv path)
                pl.BlockSpec((N, C, L), lambda i: (0, 0, 0)),    # unpadded x (residual)
                pl.BlockSpec((C, K * C), lambda i: (0, 0)),      # conv1 weight (im2col)
                pl.BlockSpec((C, K * C), lambda i: (0, 0)),      # conv2 weight (im2col)
                pl.BlockSpec((C, 1), lambda i: (0, 0)),          # bn1 gamma
                pl.BlockSpec((C, 1), lambda i: (0, 0)),          # bn1 beta
                pl.BlockSpec((C, 1), lambda i: (0, 0)),          # bn2 gamma
                pl.BlockSpec((C, 1), lambda i: (0, 0)),          # bn2 beta
            ],
            out_specs=pl.BlockSpec((N, C, L), lambda i: (0, 0, 0)),
            scratch_shapes=[
                pltpu.VMEM((N, C, Lp), jnp.float32),  # padded ELU(bn1(conv1)) staging
            ],
        ),
        compiler_params=pltpu.CompilerParams(dimension_semantics=("arbitrary",)),
    )(xp, x, w1_f, w2_f, g1_c, b1_c, g2_c, b2_c)

    return out


def basic_block_reference(x, w1, w2, g1, b1, g2, b2, eps=1e-5):
    """Pure-JAX reference identical to the PyTorch forward (training-mode BN)."""
    dn = ("NCH", "OIH", "NCH")
    P = w1.shape[-1] // 2

    def conv(v, w):
        return jax.lax.conv_general_dilated(v, w, window_strides=(1,),
                                            padding=[(P, P)],
                                            dimension_numbers=dn)

    def bn(v, g, b):
        mean = v.mean(axis=(0, 2), keepdims=True)
        var = ((v - mean) ** 2).mean(axis=(0, 2), keepdims=True)
        return (v - mean) * jax.lax.rsqrt(var + eps) * g[None, :, None] + b[None, :, None]

    def elu(v):
        return jnp.where(v > 0, v, jnp.exp(v) - 1.0)

    out = elu(bn(conv(x, w1), g1, b1))
    out = bn(conv(out, w2), g2, b2)
    return elu(out + x)


if __name__ == "__main__":
    # small shapes: batch=2, inplanes=planes=8, seq_len=16, kernel_size=3, stride=1
    N, C, L, K = 2, 8, 16, 3

    key = jax.random.PRNGKey(0)
    kx, kw1, kw2, kg1, kb1, kg2, kb2 = jax.random.split(key, 7)

    x = jax.random.normal(kx, (N, C, L), dtype=jnp.float32)
    w1 = jax.random.normal(kw1, (C, C, K), dtype=jnp.float32) * 0.2   # conv1.weight (Cout,Cin,K)
    w2 = jax.random.normal(kw2, (C, C, K), dtype=jnp.float32) * 0.2   # conv2.weight
    g1 = 1.0 + 0.1 * jax.random.normal(kg1, (C,), dtype=jnp.float32)  # bn1.weight
    b1 = 0.1 * jax.random.normal(kb1, (C,), dtype=jnp.float32)        # bn1.bias
    g2 = 1.0 + 0.1 * jax.random.normal(kg2, (C,), dtype=jnp.float32)  # bn2.weight
    b2 = 0.1 * jax.random.normal(kb2, (C,), dtype=jnp.float32)        # bn2.bias

    out = basic_block_forward(x, w1, w2, g1, b1, g2, b2)
    out = jax.block_until_ready(out)

    ref = basic_block_reference(x, w1, w2, g1, b1, g2, b2)
    assert out.shape == (N, C, L)
    assert jnp.allclose(out, ref, atol=1e-4, rtol=1e-4), "mismatch vs pure-JAX reference"

    print("KERNEL_OK")
</pallas_src>

<mosaic_0001>
module attributes {stable_mosaic.version = 11 : i64} {
  func.func @kernel(%arg0: i32, %arg1: memref<2x8x18xf32, #tpu.memory_space<vmem>>, %arg2: memref<2x8x16xf32, #tpu.memory_space<vmem>>, %arg3: memref<8x24xf32, #tpu.memory_space<vmem>>, %arg4: memref<8x24xf32, #tpu.memory_space<vmem>>, %arg5: memref<8x1xf32, #tpu.memory_space<vmem>>, %arg6: memref<8x1xf32, #tpu.memory_space<vmem>>, %arg7: memref<8x1xf32, #tpu.memory_space<vmem>>, %arg8: memref<8x1xf32, #tpu.memory_space<vmem>>, %arg9: memref<2x8x16xf32, #tpu.memory_space<vmem>>, %arg10: memref<2x8x18xf32, #tpu.memory_space<vmem>>) attributes {dimension_semantics = [#tpu.dimension_semantics<arbitrary>], iteration_bounds = array<i64: 1>, scalar_prefetch = 0 : i64, scratch_operands = 1 : i64, tpu.core_type = #tpu.core_type<tc>, window_params = [{pipeline_mode = #tpu.pipeline_mode<synchronous>, transform_indices = @transform_0, window_bounds = array<i64: 2, 8, 18>}, {pipeline_mode = #tpu.pipeline_mode<synchronous>, transform_indices = @transform_1, window_bounds = array<i64: 2, 8, 16>}, {pipeline_mode = #tpu.pipeline_mode<synchronous>, transform_indices = @transform_2, window_bounds = array<i64: 8, 24>}, {pipeline_mode = #tpu.pipeline_mode<synchronous>, transform_indices = @transform_3, window_bounds = array<i64: 8, 24>}, {pipeline_mode = #tpu.pipeline_mode<synchronous>, transform_indices = @transform_4, window_bounds = array<i64: 8, 1>}, {pipeline_mode = #tpu.pipeline_mode<synchronous>, transform_indices = @transform_5, window_bounds = array<i64: 8, 1>}, {pipeline_mode = #tpu.pipeline_mode<synchronous>, transform_indices = @transform_6, window_bounds = array<i64: 8, 1>}, {pipeline_mode = #tpu.pipeline_mode<synchronous>, transform_indices = @transform_7, window_bounds = array<i64: 8, 1>}, {pipeline_mode = #tpu.pipeline_mode<synchronous>, transform_indices = @transform_8, window_bounds = array<i64: 2, 8, 16>}]} {
    %c0 = arith.constant 0 : index
    %c0_0 = arith.constant 0 : index
    %c0_1 = arith.constant 0 : index
    %0 = vector.load %arg1[%c0, %c0_0, %c0_1] : memref<2x8x18xf32, #tpu.memory_space<vmem>>, vector<1x8x16xf32>
    %1 = vector.shape_cast %0 : vector<1x8x16xf32> to vector<8x16xf32>
    %c1 = arith.constant 1 : index
    %c0_2 = arith.constant 0 : index
    %c0_3 = arith.constant 0 : index
    %2 = vector.load %arg1[%c1, %c0_2, %c0_3] : memref<2x8x18xf32, #tpu.memory_space<vmem>>, vector<1x8x16xf32>
    %3 = vector.shape_cast %2 : vector<1x8x16xf32> to vector<8x16xf32>
    %4 = tpu.concatenate %1, %3 in 1 : vector<8x16xf32>, vector<8x16xf32> -> vector<8x32xf32>
    %c0_4 = arith.constant 0 : index
    %c0_5 = arith.constant 0 : index
    %c1_6 = arith.constant 1 : index
    %5 = vector.load %arg1[%c0_4, %c0_5, %c1_6] : memref<2x8x18xf32, #tpu.memory_space<vmem>>, vector<1x8x16xf32>
    %6 = vector.shape_cast %5 : vector<1x8x16xf32> to vector<8x16xf32>
    %c1_7 = arith.constant 1 : index
    %c0_8 = arith.constant 0 : index
    %c1_9 = arith.constant 1 : index
    %7 = vector.load %arg1[%c1_7, %c0_8, %c1_9] : memref<2x8x18xf32, #tpu.memory_space<vmem>>, vector<1x8x16xf32>
    %8 = vector.shape_cast %7 : vector<1x8x16xf32> to vector<8x16xf32>
    %9 = tpu.concatenate %6, %8 in 1 : vector<8x16xf32>, vector<8x16xf32> -> vector<8x32xf32>
    %c0_10 = arith.constant 0 : index
    %c0_11 = arith.constant 0 : index
    %c2 = arith.constant 2 : index
    %10 = vector.load %arg1[%c0_10, %c0_11, %c2] : memref<2x8x18xf32, #tpu.memory_space<vmem>>, vector<1x8x16xf32>
    %11 = vector.shape_cast %10 : vector<1x8x16xf32> to vector<8x16xf32>
    %c1_12 = arith.constant 1 : index
    %c0_13 = arith.constant 0 : index
    %c2_14 = arith.constant 2 : index
    %12 = vector.load %arg1[%c1_12, %c0_13, %c2_14] : memref<2x8x18xf32, #tpu.memory_space<vmem>>, vector<1x8x16xf32>
    %13 = vector.shape_cast %12 : vector<1x8x16xf32> to vector<8x16xf32>
    %14 = tpu.concatenate %11, %13 in 1 : vector<8x16xf32>, vector<8x16xf32> -> vector<8x32xf32>
    %15 = tpu.concatenate %4, %9, %14 in 0 : vector<8x32xf32>, vector<8x32xf32>, vector<8x32xf32> -> vector<24x32xf32>
    %c0_15 = arith.constant 0 : index
    %c0_16 = arith.constant 0 : index
    %16 = vector.load %arg3[%c0_15, %c0_16] : memref<8x24xf32, #tpu.memory_space<vmem>>, vector<8x24xf32>
    %cst = arith.constant dense<0.000000e+00> : vector<8x32xf32>
    %17 = tpu.matmul %16, %15, %cst {dimension_numbers = #tpu.dot_dimension_numbers<[1], [0], [0], [1], [0, 0, 1, 1], [], []>} : vector<8x24xf32>, vector<24x32xf32>, vector<8x32xf32> -> vector<8x32xf32>
    %cst_17 = arith.constant dense<0.000000e+00> : vector<8xf32>
    %18 = vector.multi_reduction <add>, %17, %cst_17 [1] : vector<8x32xf32> to vector<8xf32>
    %19 = vector.shape_cast %18 : vector<8xf32> to vector<8x1xf32>
    %cst_18 = arith.constant 3.125000e-02 : f32
    %20 = vector.broadcast %cst_18 : f32 to vector<8x1xf32>
    %21 = arith.mulf %19, %20 : vector<8x1xf32>
    %22 = arith.mulf %17, %17 : vector<8x32xf32>
    %cst_19 = arith.constant dense<0.000000e+00> : vector<8xf32>
    %23 = vector.multi_reduction <add>, %22, %cst_19 [1] : vector<8x32xf32> to vector<8xf32>
    %24 = vector.shape_cast %23 : vector<8xf32> to vector<8x1xf32>
    %cst_20 = arith.constant 3.125000e-02 : f32
    %25 = vector.broadcast %cst_20 : f32 to vector<8x1xf32>
    %26 = arith.mulf %24, %25 : vector<8x1xf32>
    %27 = arith.mulf %21, %21 : vector<8x1xf32>
    %28 = arith.subf %26, %27 : vector<8x1xf32>
    %cst_21 = arith.constant 9.99999974E-6 : f32
    %29 = vector.broadcast %cst_21 : f32 to vector<8x1xf32>
    %30 = arith.addf %28, %29 : vector<8x1xf32>
    %31 = math.rsqrt %30 : vector<8x1xf32>
    %c0_22 = arith.constant 0 : index
    %c0_23 = arith.constant 0 : index
    %32 = vector.load %arg5[%c0_22, %c0_23] : memref<8x1xf32, #tpu.memory_space<vmem>>, vector<8x1xf32>
    %33 = arith.mulf %31, %32 : vector<8x1xf32>
    %c0_24 = arith.constant 0 : index
    %c0_25 = arith.constant 0 : index
    %34 = vector.load %arg6[%c0_24, %c0_25] : memref<8x1xf32, #tpu.memory_space<vmem>>, vector<8x1xf32>
    %35 = arith.mulf %21, %33 : vector<8x1xf32>
    %36 = arith.subf %34, %35 : vector<8x1xf32>
    %37 = vector.shape_cast %33 : vector<8x1xf32> to vector<8x1xf32>
    %38 = vector.broadcast %37 : vector<8x1xf32> to vector<8x32xf32>
    %39 = vector.shape_cast %36 : vector<8x1xf32> to vector<8x1xf32>
    %40 = vector.broadcast %39 : vector<8x1xf32> to vector<8x32xf32>
    %41 = arith.mulf %17, %38 : vector<8x32xf32>
    %42 = arith.addf %41, %40 : vector<8x32xf32>
    %cst_26 = arith.constant 0.000000e+00 : f32
    %43 = vector.broadcast %cst_26 : f32 to vector<8x32xf32>
    %44 = arith.cmpf ogt, %42, %43 : vector<8x32xf32>
    %45 = math.exp %42 : vector<8x32xf32>
    %cst_27 = arith.constant 1.000000e+00 : f32
    %46 = vector.broadcast %cst_27 : f32 to vector<8x32xf32>
    %47 = arith.subf %45, %46 : vector<8x32xf32>
    %48 = arith.select %44, %42, %47 : vector<8x32xi1>, vector<8x32xf32>
    %cst_28 = arith.constant 0.000000e+00 : f32
    %49 = vector.broadcast %cst_28 : f32 to vector<8x1xf32>
    %c0_29 = arith.constant 0 : index
    %c0_30 = arith.constant 0 : index
    %c0_31 = arith.constant 0 : index
    %50 = vector.load %arg10[%c0_29, %c0_30, %c0_31] : memref<2x8x18xf32, #tpu.memory_space<vmem>>, vector<1x8x1xf32>
    %51 = vector.shape_cast %50 : vector<1x8x1xf32> to vector<8x1xf32>
    %52 = vector.shape_cast %49 : vector<8x1xf32> to vector<1x8x1xf32>
    tpu.vector_store %arg10[%c0_29, %c0_30, %c0_31], %52 {strides = array<i32>} : memref<2x8x18xf32, #tpu.memory_space<vmem>>, vector<1x8x1xf32>,
    %c0_32 = arith.constant 0 : index
    %c0_33 = arith.constant 0 : index
    %c17 = arith.constant 17 : index
    %53 = vector.load %arg10[%c0_32, %c0_33, %c17] : memref<2x8x18xf32, #tpu.memory_space<vmem>>, vector<1x8x1xf32>
    %54 = vector.shape_cast %53 : vector<1x8x1xf32> to vector<8x1xf32>
    %55 = vector.shape_cast %49 : vector<8x1xf32> to vector<1x8x1xf32>
    tpu.vector_store %arg10[%c0_32, %c0_33, %c17], %55 {strides = array<i32>} : memref<2x8x18xf32, #tpu.memory_space<vmem>>, vector<1x8x1xf32>,
    %c1_34 = arith.constant 1 : index
    %c0_35 = arith.constant 0 : index
    %c0_36 = arith.constant 0 : index
    %56 = vector.load %arg10[%c1_34, %c0_35, %c0_36] : memref<2x8x18xf32, #tpu.memory_space<vmem>>, vector<1x8x1xf32>
    %57 = vector.shape_cast %56 : vector<1x8x1xf32> to vector<8x1xf32>
    %58 = vector.shape_cast %49 : vector<8x1xf32> to vector<1x8x1xf32>
    tpu.vector_store %arg10[%c1_34, %c0_35, %c0_36], %58 {strides = array<i32>} : memref<2x8x18xf32, #tpu.memory_space<vmem>>, vector<1x8x1xf32>,
    %c1_37 = arith.constant 1 : index
    %c0_38 = arith.constant 0 : index
    %c17_39 = arith.constant 17 : index
    %59 = vector.load %arg10[%c1_37, %c0_38, %c17_39] : memref<2x8x18xf32, #tpu.memory_space<vmem>>, vector<1x8x1xf32>
    %60 = vector.shape_cast %59 : vector<1x8x1xf32> to vector<8x1xf32>
    %61 = vector.shape_cast %49 : vector<8x1xf32> to vector<1x8x1xf32>
    tpu.vector_store %arg10[%c1_37, %c0_38, %c17_39], %61 {strides = array<i32>} : memref<2x8x18xf32, #tpu.memory_space<vmem>>, vector<1x8x1xf32>,
    %62 = vector.extract_strided_slice %48 {offsets = [0, 0], sizes = [8, 16], strides = [1, 1]} : vector<8x32xf32> to vector<8x16xf32>
    %c0_40 = arith.constant 0 : index
    %c0_41 = arith.constant 0 : index
    %c1_42 = arith.constant 1 : index
    %63 = vector.load %arg10[%c0_40, %c0_41, %c1_42] : memref<2x8x18xf32, #tpu.memory_space<vmem>>, vector<1x8x16xf32>
    %64 = vector.shape_cast %63 : vector<1x8x16xf32> to vector<8x16xf32>
    %65 = vector.shape_cast %62 : vector<8x16xf32> to vector<1x8x16xf32>
    tpu.vector_store %arg10[%c0_40, %c0_41, %c1_42], %65 {strides = array<i32>} : memref<2x8x18xf32, #tpu.memory_space<vmem>>, vector<1x8x16xf32>,
    %66 = vector.extract_strided_slice %48 {offsets = [0, 16], sizes = [8, 16], strides = [1, 1]} : vector<8x32xf32> to vector<8x16xf32>
    %c1_43 = arith.constant 1 : index
    %c0_44 = arith.constant 0 : index
    %c1_45 = arith.constant 1 : index
    %67 = vector.load %arg10[%c1_43, %c0_44, %c1_45] : memref<2x8x18xf32, #tpu.memory_space<vmem>>, vector<1x8x16xf32>
    %68 = vector.shape_cast %67 : vector<1x8x16xf32> to vector<8x16xf32>
    %69 = vector.shape_cast %66 : vector<8x16xf32> to vector<1x8x16xf32>
    tpu.vector_store %arg10[%c1_43, %c0_44, %c1_45], %69 {strides = array<i32>} : memref<2x8x18xf32, #tpu.memory_space<vmem>>, vector<1x8x16xf32>,
    %c0_46 = arith.constant 0 : index
    %c0_47 = arith.constant 0 : index
    %c0_48 = arith.constant 0 : index
    %70 = vector.load %arg10[%c0_46, %c0_47, %c0_48] : memref<2x8x18xf32, #tpu.memory_space<vmem>>, vector<1x8x16xf32>
    %71 = vector.shape_cast %70 : vector<1x8x16xf32> to vector<8x16xf32>
    %c1_49 = arith.constant 1 : index
    %c0_50 = arith.constant 0 : index
    %c0_51 = arith.constant 0 : index
    %72 = vector.load %arg10[%c1_49, %c0_50, %c0_51] : memref<2x8x18xf32, #tpu.memory_space<vmem>>, vector<1x8x16xf32>
    %73 = vector.shape_cast %72 : vector<1x8x16xf32> to vector<8x16xf32>
    %74 = tpu.concatenate %71, %73 in 1 : vector<8x16xf32>, vector<8x16xf32> -> vector<8x32xf32>
    %c0_52 = arith.constant 0 : index
    %c0_53 = arith.constant 0 : index
    %c1_54 = arith.constant 1 : index
    %75 = vector.load %arg10[%c0_52, %c0_53, %c1_54] : memref<2x8x18xf32, #tpu.memory_space<vmem>>, vector<1x8x16xf32>
    %76 = vector.shape_cast %75 : vector<1x8x16xf32> to vector<8x16xf32>
    %c1_55 = arith.constant 1 : index
    %c0_56 = arith.constant 0 : index
    %c1_57 = arith.constant 1 : index
    %77 = vector.load %arg10[%c1_55, %c0_56, %c1_57] : memref<2x8x18xf32, #tpu.memory_space<vmem>>, vector<1x8x16xf32>
    %78 = vector.shape_cast %77 : vector<1x8x16xf32> to vector<8x16xf32>
    %79 = tpu.concatenate %76, %78 in 1 : vector<8x16xf32>, vector<8x16xf32> -> vector<8x32xf32>
    %c0_58 = arith.constant 0 : index
    %c0_59 = arith.constant 0 : index
    %c2_60 = arith.constant 2 : index
    %80 = vector.load %arg10[%c0_58, %c0_59, %c2_60] : memref<2x8x18xf32, #tpu.memory_space<vmem>>, vector<1x8x16xf32>
    %81 = vector.shape_cast %80 : vector<1x8x16xf32> to vector<8x16xf32>
    %c1_61 = arith.constant 1 : index
    %c0_62 = arith.constant 0 : index
    %c2_63 = arith.constant 2 : index
    %82 = vector.load %arg10[%c1_61, %c0_62, %c2_63] : memref<2x8x18xf32, #tpu.memory_space<vmem>>, vector<1x8x16xf32>
    %83 = vector.shape_cast %82 : vector<1x8x16xf32> to vector<8x16xf32>
    %84 = tpu.concatenate %81, %83 in 1 : vector<8x16xf32>, vector<8x16xf32> -> vector<8x32xf32>
    %85 = tpu.concatenate %74, %79, %84 in 0 : vector<8x32xf32>, vector<8x32xf32>, vector<8x32xf32> -> vector<24x32xf32>
    %c0_64 = arith.constant 0 : index
    %c0_65 = arith.constant 0 : index
    %86 = vector.load %arg4[%c0_64, %c0_65] : memref<8x24xf32, #tpu.memory_space<vmem>>, vector<8x24xf32>
    %cst_66 = arith.constant dense<0.000000e+00> : vector<8x32xf32>
    %87 = tpu.matmul %86, %85, %cst_66 {dimension_numbers = #tpu.dot_dimension_numbers<[1], [0], [0], [1], [0, 0, 1, 1], [], []>} : vector<8x24xf32>, vector<24x32xf32>, vector<8x32xf32> -> vector<8x32xf32>
    %cst_67 = arith.constant dense<0.000000e+00> : vector<8xf32>
    %88 = vector.multi_reduction <add>, %87, %cst_67 [1] : vector<8x32xf32> to vector<8xf32>
    %89 = vector.shape_cast %88 : vector<8xf32> to vector<8x1xf32>
    %cst_68 = arith.constant 3.125000e-02 : f32
    %90 = vector.broadcast %cst_68 : f32 to vector<8x1xf32>
    %91 = arith.mulf %89, %90 : vector<8x1xf32>
    %92 = arith.mulf %87, %87 : vector<8x32xf32>
    %cst_69 = arith.constant dense<0.000000e+00> : vector<8xf32>
    %93 = vector.multi_reduction <add>, %92, %cst_69 [1] : vector<8x32xf32> to vector<8xf32>
    %94 = vector.shape_cast %93 : vector<8xf32> to vector<8x1xf32>
    %cst_70 = arith.constant 3.125000e-02 : f32
    %95 = vector.broadcast %cst_70 : f32 to vector<8x1xf32>
    %96 = arith.mulf %94, %95 : vector<8x1xf32>
    %97 = arith.mulf %91, %91 : vector<8x1xf32>
    %98 = arith.subf %96, %97 : vector<8x1xf32>
    %cst_71 = arith.constant 9.99999974E-6 : f32
    %99 = vector.broadcast %cst_71 : f32 to vector<8x1xf32>
    %100 = arith.addf %98, %99 : vector<8x1xf32>
    %101 = math.rsqrt %100 : vector<8x1xf32>
    %c0_72 = arith.constant 0 : index
    %c0_73 = arith.constant 0 : index
    %102 = vector.load %arg7[%c0_72, %c0_73] : memref<8x1xf32, #tpu.memory_space<vmem>>, vector<8x1xf32>
    %103 = arith.mulf %101, %102 : vector<8x1xf32>
    %c0_74 = arith.constant 0 : index
    %c0_75 = arith.constant 0 : index
    %104 = vector.load %arg8[%c0_74, %c0_75] : memref<8x1xf32, #tpu.memory_space<vmem>>, vector<8x1xf32>
    %105 = arith.mulf %91, %103 : vector<8x1xf32>
    %106 = arith.subf %104, %105 : vector<8x1xf32>
    %107 = vector.shape_cast %103 : vector<8x1xf32> to vector<8x1xf32>
    %108 = vector.broadcast %107 : vector<8x1xf32> to vector<8x16xf32>
    %109 = vector.shape_cast %106 : vector<8x1xf32> to vector<8x1xf32>
    %110 = vector.broadcast %109 : vector<8x1xf32> to vector<8x16xf32>
    %111 = vector.extract_strided_slice %87 {offsets = [0, 0], sizes = [8, 16], strides = [1, 1]} : vector<8x32xf32> to vector<8x16xf32>
    %112 = arith.mulf %111, %108 : vector<8x16xf32>
    %113 = arith.addf %112, %110 : vector<8x16xf32>
    %c0_76 = arith.constant 0 : index
    %c0_77 = arith.constant 0 : index
    %c0_78 = arith.constant 0 : index
    %114 = vector.load %arg2[%c0_76, %c0_77, %c0_78] : memref<2x8x16xf32, #tpu.memory_space<vmem>>, vector<1x8x16xf32>
    %115 = vector.shape_cast %114 : vector<1x8x16xf32> to vector<8x16xf32>
    %116 = arith.addf %113, %115 : vector<8x16xf32>
    %cst_79 = arith.constant 0.000000e+00 : f32
    %117 = vector.broadcast %cst_79 : f32 to vector<8x16xf32>
    %118 = arith.cmpf ogt, %116, %117 : vector<8x16xf32>
    %119 = math.exp %116 : vector<8x16xf32>
    %cst_80 = arith.constant 1.000000e+00 : f32
    %120 = vector.broadcast %cst_80 : f32 to vector<8x16xf32>
    %121 = arith.subf %119, %120 : vector<8x16xf32>
    %122 = arith.select %118, %116, %121 : vector<8x16xi1>, vector<8x16xf32>
    %c0_81 = arith.constant 0 : index
    %c0_82 = arith.constant 0 : index
    %c0_83 = arith.constant 0 : index
    %123 = vector.load %arg9[%c0_81, %c0_82, %c0_83] : memref<2x8x16xf32, #tpu.memory_space<vmem>>, vector<1x8x16xf32>
    %124 = vector.shape_cast %123 : vector<1x8x16xf32> to vector<8x16xf32>
    %125 = vector.shape_cast %122 : vector<8x16xf32> to vector<1x8x16xf32>
    tpu.vector_store %arg9[%c0_81, %c0_82, %c0_83], %125 {strides = array<i32>} : memref<2x8x16xf32, #tpu.memory_space<vmem>>, vector<1x8x16xf32>,
    %126 = vector.extract_strided_slice %87 {offsets = [0, 16], sizes = [8, 16], strides = [1, 1]} : vector<8x32xf32> to vector<8x16xf32>
    %127 = arith.mulf %126, %108 : vector<8x16xf32>
    %128 = arith.addf %127, %110 : vector<8x16xf32>
    %c1_84 = arith.constant 1 : index
    %c0_85 = arith.constant 0 : index
    %c0_86 = arith.constant 0 : index
    %129 = vector.load %arg2[%c1_84, %c0_85, %c0_86] : memref<2x8x16xf32, #tpu.memory_space<vmem>>, vector<1x8x16xf32>
    %130 = vector.shape_cast %129 : vector<1x8x16xf32> to vector<8x16xf32>
    %131 = arith.addf %128, %130 : vector<8x16xf32>
    %cst_87 = arith.constant 0.000000e+00 : f32
    %132 = vector.broadcast %cst_87 : f32 to vector<8x16xf32>
    %133 = arith.cmpf ogt, %131, %132 : vector<8x16xf32>
    %134 = math.exp %131 : vector<8x16xf32>
    %cst_88 = arith.constant 1.000000e+00 : f32
    %135 = vector.broadcast %cst_88 : f32 to vector<8x16xf32>
    %136 = arith.subf %134, %135 : vector<8x16xf32>
    %137 = arith.select %133, %131, %136 : vector<8x16xi1>, vector<8x16xf32>
    %c1_89 = arith.constant 1 : index
    %c0_90 = arith.constant 0 : index
    %c0_91 = arith.constant 0 : index
    %138 = vector.load %arg9[%c1_89, %c0_90, %c0_91] : memref<2x8x16xf32, #tpu.memory_space<vmem>>, vector<1x8x16xf32>
    %139 = vector.shape_cast %138 : vector<1x8x16xf32> to vector<8x16xf32>
    %140 = vector.shape_cast %137 : vector<8x16xf32> to vector<1x8x16xf32>
    tpu.vector_store %arg9[%c1_89, %c0_90, %c0_91], %140 {strides = array<i32>} : memref<2x8x16xf32, #tpu.memory_space<vmem>>, vector<1x8x16xf32>,
    return
  }
  func.func @transform_0(%arg0: i32) -> (i32, i32, i32) {
    %c0_i32 = arith.constant 0 : i32
    %c0_i32_0 = arith.constant 0 : i32
    %c0_i32_1 = arith.constant 0 : i32
    %c0_i32_2 = arith.constant 0 : i32
    return %c0_i32, %c0_i32_0, %c0_i32_1 : i32, i32, i32
  }
  func.func @transform_1(%arg0: i32) -> (i32, i32, i32) {
    %c0_i32 = arith.constant 0 : i32
    %c0_i32_0 = arith.constant 0 : i32
    %c0_i32_1 = arith.constant 0 : i32
    %c0_i32_2 = arith.constant 0 : i32
    return %c0_i32, %c0_i32_0, %c0_i32_1 : i32, i32, i32
  }
  func.func @transform_2(%arg0: i32) -> (i32, i32) {
    %c0_i32 = arith.constant 0 : i32
    %c0_i32_0 = arith.constant 0 : i32
    %c0_i32_1 = arith.constant 0 : i32
    return %c0_i32, %c0_i32_0 : i32, i32
  }
  func.func @transform_3(%arg0: i32) -> (i32, i32) {
    %c0_i32 = arith.constant 0 : i32
    %c0_i32_0 = arith.constant 0 : i32
    %c0_i32_1 = arith.constant 0 : i32
    return %c0_i32, %c0_i32_0 : i32, i32
  }
  func.func @transform_4(%arg0: i32) -> (i32, i32) {
    %c0_i32 = arith.constant 0 : i32
    %c0_i32_0 = arith.constant 0 : i32
    %c0_i32_1 = arith.constant 0 : i32
    return %c0_i32, %c0_i32_0 : i32, i32
  }
  func.func @transform_5(%arg0: i32) -> (i32, i32) {
    %c0_i32 = arith.constant 0 : i32
    %c0_i32_0 = arith.constant 0 : i32
    %c0_i32_1 = arith.constant 0 : i32
    return %c0_i32, %c0_i32_0 : i32, i32
  }
  func.func @transform_6(%arg0: i32) -> (i32, i32) {
    %c0_i32 = arith.constant 0 : i32
    %c0_i32_0 = arith.constant 0 : i32
    %c0_i32_1 = arith.constant 0 : i32
    return %c0_i32, %c0_i32_0 : i32, i32
  }
  func.func @transform_7(%arg0: i32) -> (i32, i32) {
    %c0_i32 = arith.constant 0 : i32
    %c0_i32_0 = arith.constant 0 : i32
    %c0_i32_1 = arith.constant 0 : i32
    return %c0_i32, %c0_i32_0 : i32, i32
  }
  func.func @transform_8(%arg0: i32) -> (i32, i32, i32) {
    %c0_i32 = arith.constant 0 : i32
    %c0_i32_0 = arith.constant 0 : i32
    %c0_i32_1 = arith.constant 0 : i32
    %c0_i32_2 = arith.constant 0 : i32
    return %c0_i32, %c0_i32_0, %c0_i32_1 : i32, i32, i32
  }
}

</mosaic_0001>

<llo_original>
// kernel: tpu_custom_call.1
$region0: #{tpu_custom_call.1}
  #allocation0 [shape = 'u32[]', space=smem, size = 0x4, offset = 0x4, fixed_abs, tag = 'smem constant byte address 0x4 - core index']
  #allocation1 [shape = 'u32[144,128]{1,0:T(1,128)}', space=vmem, size = 0x12000, scoped, tag = 'internal scratch']
  #allocation2 [shape = 'f32[2,8,18]{2,1,0:T(8,128)}', space=vmem, size = 0x2000, scoped, tag = 'scratch operand']
  %s0 = inlined_call_operand.vmem [shape: f32[2,8,18], index: 0, kind: input, shape index: {}]
  %s1 = inlined_call_operand.vmem [shape: f32[2,8,16], index: 1, kind: input, shape index: {}]
  %s2 = inlined_call_operand.hbm [shape: f32[8,24], index: 2, kind: input, shape index: {}]
  %s3 = inlined_call_operand.vmem [shape: f32[8,24], index: 3, kind: input, shape index: {}]
  %s4 = inlined_call_operand.vmem [shape: f32[8,1], index: 4, kind: input, shape index: {}]
  %s5 = inlined_call_operand.vmem [shape: f32[8,1], index: 5, kind: input, shape index: {}]
  %s6 = inlined_call_operand.vmem [shape: f32[8,1], index: 6, kind: input, shape index: {}]
  %s7 = inlined_call_operand.vmem [shape: f32[8,1], index: 7, kind: input, shape index: {}]
  %s8 = inlined_call_operand.hbm [shape: f32[2,8,16], index: 8, kind: output, shape index: {}]
  %s9 = sld [smem:[#allocation0]]
  $region46: #{tpu_custom_call.1} parent=0
    _
  %s11 = ssub.s32 1, %s9
  %s12 = scalar_select 0, %s11, %s9
  $region1: #{tpu_custom_call.1} parent=0
    #allocation3 [shape = 'u8[4096]{0}', space=vmem, size = 0x1000, scoped, tag = 'input window, operand 2, single buffered']
    #allocation4 [shape = 's32[1]{0}', space=sflag, size = 0x4, scoped, tag = 'scoped memory for tpu_custom_call.1']
    #allocation5 [shape = 's32[1]{0}', space=sflag, size = 0x4, scoped, tag = 'scoped memory for tpu_custom_call.1']
    #allocation6 [shape = 'u8[8192]{0}', space=vmem, size = 0x2000, scoped, tag = 'output window, operand 0, single buffered']
    %13 = vsyncpa [#allocation4], 0
    %14 = vsyncpa [#allocation5], 0
    // Predicated region
    $region2: #{tpu_custom_call.1} parent=1 // pred_check
      _
    $region3: #{tpu_custom_call.1} parent=1 // pred_check_branch
      %16 = sbr.rel (0) target = $region5
    $region4: #{tpu_custom_call.1} parent=1 // pred_region
      _
    $region5: #{tpu_custom_call.1} parent=1 // pred_fallthru
      _
    // Predicated region
    $region6: #{tpu_custom_call.1} parent=1 // pred_check
      _
    $region7: #{tpu_custom_call.1} parent=1 // pred_check_branch
      %18 = sbr.rel (0) target = $region9
    $region8: #{tpu_custom_call.1} parent=1 // pred_region
      _
    $region9: #{tpu_custom_call.1} parent=1 // pred_fallthru
      _
    // Predicated region
    $region10: #{tpu_custom_call.1} parent=1 // pred_check
      _
    $region11: #{tpu_custom_call.1} parent=1 // pred_check_branch
      %20 = sbr.rel (0) target = $region13
    $region12: #{tpu_custom_call.1} parent=1 // pred_region
      %s22 = ssub.s32 128, 128
      %23 = vsyncadd [#allocation4], %s22
      %s25 = sshll.u32 [#allocation3], 4
      %s26 = int_to_ptr.vmem [resolvable:$true] %s25
      %28 = dma.hbm_to_vmem [thread:$0]  %s2, 128, %s26, [#allocation4]
    $region13: #{tpu_custom_call.1} parent=1 // pred_fallthru
      _
    // Predicated region
    $region14: #{tpu_custom_call.1} parent=1 // pred_check
      _
    $region15: #{tpu_custom_call.1} parent=1 // pred_check_branch
      %30 = sbr.rel (0) target = $region17
    $region16: #{tpu_custom_call.1} parent=1 // pred_region
      _
    $region17: #{tpu_custom_call.1} parent=1 // pred_fallthru
      _
    // Predicated region
    $region18: #{tpu_custom_call.1} parent=1 // pred_check
      _
    $region19: #{tpu_custom_call.1} parent=1 // pred_check_branch
      %32 = sbr.rel (0) target = $region21
    $region20: #{tpu_custom_call.1} parent=1 // pred_region
      _
    $region21: #{tpu_custom_call.1} parent=1 // pred_fallthru
      _
    // Predicated region
    $region22: #{tpu_custom_call.1} parent=1 // pred_check
      _
    $region23: #{tpu_custom_call.1} parent=1 // pred_check_branch
      %34 = sbr.rel (0) target = $region25
    $region24: #{tpu_custom_call.1} parent=1 // pred_region
      _
    $region25: #{tpu_custom_call.1} parent=1 // pred_fallthru
      _
    // Predicated region
    $region26: #{tpu_custom_call.1} parent=1 // pred_check
      _
    $region27: #{tpu_custom_call.1} parent=1 // pred_check_branch
      %36 = sbr.rel (0) target = $region29
    $region28: #{tpu_custom_call.1} parent=1 // pred_region
      _
    $region29: #{tpu_custom_call.1} parent=1 // pred_fallthru
      _
    // Predicated region
    $region30: #{tpu_custom_call.1} parent=1 // pred_check
      _
    $region31: #{tpu_custom_call.1} parent=1 // pred_check_branch
      %38 = sbr.rel (0) target = $region33
    $region32: #{tpu_custom_call.1} parent=1 // pred_region
      _
    $region33: #{tpu_custom_call.1} parent=1 // pred_fallthru
      _
    // Predicated region
    $region34: #{tpu_custom_call.1} parent=1 // pred_check
      _
    $region35: #{tpu_custom_call.1} parent=1 // pred_check_branch
      %40 = sbr.rel (0) target = $region37
    $region36: #{tpu_custom_call.1} parent=1 // pred_region
      %41 = dma.done [#allocation4], 128
    $region37: #{tpu_custom_call.1} parent=1 // pred_fallthru
      _
    %v42 = vld [vmem:[%s0] sm:$0xff]
    %s43 = scalar_lea.vmem %s0, 8
    %v44 = vld [vmem:[%s43] sm:$0xff]
    %46 = vrot.lane.b32.xlu0 %v44, 16
    %v47 = vpop.permute.xlu0 %46
    %vm49 = vcmask 130048
    %v50 = vsel %vm49, %v42, %v47
    %52 = vrot.lane.b32.xlu0 %v42, 127
    %v53 = vpop.permute.xlu0 %52
    %55 = vrot.lane.b32.xlu0 %v44, 15
    %v56 = vpop.permute.xlu0 %55
    %v58 = vsel %vm49, %v53, %v56
    %59 = vrot.lane.b32.xlu0 %v42, 126
    %v60 = vpop.permute.xlu0 %59
    %62 = vrot.lane.b32.xlu0 %v44, 14
    %v63 = vpop.permute.xlu0 %62
    %v65 = vsel %vm49, %v60, %v63
    %v66 = vld [vmem:[#allocation3] sm:$0xff]
    %vm67 = vcmask 195584
    %v69 = vsel %vm67, %v66, 0
    %71 = vmatprep.subr.mxu0 0.0
    %72 = vmatpush1.msra.mxu0 0.0
    %73 = vmatprep.subr.mxu0 0.0
    %74 = vmatpush1.msra.mxu0 0.0
    %75 = vmatprep.subr.mxu0 0.0
    %76 = vmatpush1.msra.mxu0 0.0
    %77 = vmatprep.subr.mxu0 0.0
    %78 = vmatpush1.msra.mxu0 0.0
    %79 = vmatprep.subr.mxu0 0.0
    %80 = vmatpush1.msra.mxu0 0.0
    %81 = vmatprep.subr.mxu0 0.0
    %82 = vmatpush1.msra.mxu0 0.0
    %83 = vmatprep.subr.mxu0 0.0
    %84 = vmatpush1.msra.mxu0 0.0
    %85 = vmatprep.subr.mxu0 0.0
    %86 = vmatpush1.msra.mxu0 0.0
    %87 = vmatprep.subr.mxu0 0.0
    %88 = vmatpush1.msra.mxu0 0.0
    %89 = vmatprep.subr.mxu0 0.0
    %90 = vmatpush1.msra.mxu0 0.0
    %91 = vmatprep.subr.mxu0 0.0
    %92 = vmatpush1.msra.mxu0 0.0
    %93 = vmatprep.subr.mxu0 0.0
    %94 = vmatpush1.msra.mxu0 0.0
    %95 = vmatprep.subr.mxu0 0.0
    %96 = vmatpush1.msra.mxu0 0.0
    %97 = vmatprep.subr.mxu0 0.0
    %98 = vmatpush1.msra.mxu0 %v65
    %99 = vmatprep.subr.mxu0 0.0
    %100 = vmatpush1.msra.mxu0 %v58
    %101 = vmatprep.subr.mxu0 0.0
    %102 = vmatpush1.msra.mxu0 %v50
    %103 = vmatprep.subr.mxu0 0.0
    %104 = vmatpush2.msra.mxu0 0.0
    %105 = vmatprep.subr.mxu0 0.0
    %106 = vmatpush2.msra.mxu0 0.0
    %107 = vmatprep.subr.mxu0 0.0
    %108 = vmatpush2.msra.mxu0 0.0
    %109 = vmatprep.subr.mxu0 0.0
    %110 = vmatpush2.msra.mxu0 0.0
    %111 = vmatprep.subr.mxu0 0.0
    %112 = vmatpush2.msra.mxu0 0.0
    %113 = vmatprep.subr.mxu0 0.0
    %114 = vmatpush2.msra.mxu0 0.0
    %115 = vmatprep.subr.mxu0 0.0
    %116 = vmatpush2.msra.mxu0 0.0
    %117 = vmatprep.subr.mxu0 0.0
    %118 = vmatpush2.msra.mxu0 0.0
    %119 = vmatprep.subr.mxu0 0.0
    %120 = vmatpush2.msra.mxu0 0.0
    %121 = vmatprep.subr.mxu0 0.0
    %122 = vmatpush2.msra.mxu0 0.0
    %123 = vmatprep.subr.mxu0 0.0
    %124 = vmatpush2.msra.mxu0 0.0
    %125 = vmatprep.subr.mxu0 0.0
    %126 = vmatpush2.msra.mxu0 0.0
    %127 = vmatprep.subr.mxu0 0.0
    %128 = vmatpush2.msra.mxu0 0.0
    %129 = vmatprep.subr.mxu0 0.0
    %130 = vmatpush2.msra.mxu0 0.0
    %131 = vmatprep.subr.mxu0 0.0
    %132 = vmatpush2.msra.mxu0 0.0
    %133 = vmatprep.subr.mxu0 0.0
    %134 = vmatpush2.msra.mxu0 0.0
    %135 = vmatprep.mubr.f32.mxu0 0.0
    %136 = vmatmul.mubr.f32.gmra.mxu0 %v69
    %v137 = vpop.f32.mrf.mxu0
    %v138 = vadd.f32 0.0, %v137
    %v139 = vpop.f32.mrf.mxu0
    %140 = vdwg.mxu0
    %vm141 = vcmask 261120
    %v142 = vsel %vm141, %v138, 0.0
    %143 = vadd.xlane.f32.xlu0 %v142
    %v144 = vpop.xlane.xlu0 %143
    %v145 = vmul.f32 %v144, 0.03125
    %v146 = vmul.f32 %v138, %v138
    %v147 = vsel %vm141, %v146, 0.0
    %148 = vadd.xlane.f32.xlu0 %v147
    %v149 = vpop.xlane.xlu0 %148
    %v150 = vmul.f32 %v149, 0.03125
    %v151 = vmul.f32 %v145, %v145
    %v152 = vsub.f32 %v150, %v151
    %v153 = vadd.f32 %v152, 1e-05
    %v154 = vrsqrt.pop %v153
    %v155 = vld [vmem:[%s4] sm:$0xff]
    %v156 = vmul.f32 %v154, %v155
    %v157 = vld [vmem:[%s5] sm:$0xff]
    %v158 = vmul.f32 %v145, %v156
    %v159 = vsub.f32 %v157, %v158
    %161 = vset.pattern.permute.xlu0 0
    %162 = vperm.xlu0 %161, %v156
    %v163 = vpop.permute.xlu0 %162
    %166 = vset.pattern.permute.xlu0 0
    %167 = vperm.xlu0 %166, %v159
    %v168 = vpop.permute.xlu0 %167
    %v170 = vmul.f32 %v138, %v163
    %v171 = vadd.f32 %v170, %v168
    %vm172 = vcmp.gt.f32.partialorder %v171, 0.0
    %v173 = vmul.f32 %v171, 1.442695
    %v174 = vpow.pop %v173
    %v175 = vsub.f32 %v174, 1.0
    %v176 = vsel %vm172, %v171, %v175
    %vm177 = vcmask 7168
    %178 = vst.msk [vmem:[#allocation2] sm:$0xff] %vm177, 0.0
    %vm179 = vcmask 146568
    %180 = vst.msk [vmem:[#allocation2] sm:$0xff] %vm179, 0.0
    %s181 = scalar_lea.vmem [#allocation2], 8
    %182 = vst.msk [vmem:[%s181] sm:$0xff] %vm177, 0.0
    %183 = vst.msk [vmem:[%s181] sm:$0xff] %vm179, 0.0
    %185 = vrot.lane.b32.xlu0 %v176, 1
    %v186 = vpop.permute.xlu0 %185
    %vm188 = vcmask 138248
    %189 = vst.msk [vmem:[#allocation2] sm:$0xff] %vm188, %v186
    %190 = vrot.lane.b32.xlu0 %v176, 113
    %v191 = vpop.permute.xlu0 %190
    %193 = vst.msk [vmem:[%s181] sm:$0xff] %vm188, %v191
    %v194 = vld [vmem:[#allocation2] sm:$0xff]
    %v195 = vld [vmem:[%s181] sm:$0xff]
    %197 = vrot.lane.b32.xlu0 %v195, 16
    %v198 = vpop.permute.xlu0 %197
    %v200 = vsel %vm49, %v194, %v198
    %202 = vrot.lane.b32.xlu0 %v194, 127
    %v203 = vpop.permute.xlu0 %202
    %205 = vrot.lane.b32.xlu0 %v195, 15
    %v206 = vpop.permute.xlu0 %205
    %v208 = vsel %vm49, %v203, %v206
    %209 = vrot.lane.b32.xlu0 %v194, 126
    %v210 = vpop.permute.xlu0 %209
    %212 = vrot.lane.b32.xlu0 %v195, 14
    %v213 = vpop.permute.xlu0 %212
    %v215 = vsel %vm49, %v210, %v213
    %v216 = vld [vmem:[%s3] sm:$0xff]
    %v218 = vsel %vm67, %v216, 0
    %220 = vmatprep.subr.mxu0 0.0
    %221 = vmatpush1.msra.mxu0 0.0
    %222 = vmatprep.subr.mxu0 0.0
    %223 = vmatpush1.msra.mxu0 0.0
    %224 = vmatprep.subr.mxu0 0.0
    %225 = vmatpush1.msra.mxu0 0.0
    %226 = vmatprep.subr.mxu0 0.0
    %227 = vmatpush1.msra.mxu0 0.0
    %228 = vmatprep.subr.mxu0 0.0
    %229 = vmatpush1.msra.mxu0 0.0
    %230 = vmatprep.subr.mxu0 0.0
    %231 = vmatpush1.msra.mxu0 0.0
    %232 = vmatprep.subr.mxu0 0.0
    %233 = vmatpush1.msra.mxu0 0.0
    %234 = vmatprep.subr.mxu0 0.0
    %235 = vmatpush1.msra.mxu0 0.0
    %236 = vmatprep.subr.mxu0 0.0
    %237 = vmatpush1.msra.mxu0 0.0
    %238 = vmatprep.subr.mxu0 0.0
    %239 = vmatpush1.msra.mxu0 0.0
    %240 = vmatprep.subr.mxu0 0.0
    %241 = vmatpush1.msra.mxu0 0.0
    %242 = vmatprep.subr.mxu0 0.0
    %243 = vmatpush1.msra.mxu0 0.0
    %244 = vmatprep.subr.mxu0 0.0
    %245 = vmatpush1.msra.mxu0 0.0
    %246 = vmatprep.subr.mxu0 0.0
    %247 = vmatpush1.msra.mxu0 %v215
    %248 = vmatprep.subr.mxu0 0.0
    %249 = vmatpush1.msra.mxu0 %v208
    %250 = vmatprep.subr.mxu0 0.0
    %251 = vmatpush1.msra.mxu0 %v200
    %252 = vmatprep.subr.mxu0 0.0
    %253 = vmatpush2.msra.mxu0 0.0
    %254 = vmatprep.subr.mxu0 0.0
    %255 = vmatpush2.msra.mxu0 0.0
    %256 = vmatprep.subr.mxu0 0.0
    %257 = vmatpush2.msra.mxu0 0.0
    %258 = vmatprep.subr.mxu0 0.0
    %259 = vmatpush2.msra.mxu0 0.0
    %260 = vmatprep.subr.mxu0 0.0
    %261 = vmatpush2.msra.mxu0 0.0
    %262 = vmatprep.subr.mxu0 0.0
    %263 = vmatpush2.msra.mxu0 0.0
    %264 = vmatprep.subr.mxu0 0.0
    %265 = vmatpush2.msra.mxu0 0.0
    %266 = vmatprep.subr.mxu0 0.0
    %267 = vmatpush2.msra.mxu0 0.0
    %268 = vmatprep.subr.mxu0 0.0
    %269 = vmatpush2.msra.mxu0 0.0
    %270 = vmatprep.subr.mxu0 0.0
    %271 = vmatpush2.msra.mxu0 0.0
    %272 = vmatprep.subr.mxu0 0.0
    %273 = vmatpush2.msra.mxu0 0.0
    %274 = vmatprep.subr.mxu0 0.0
    %275 = vmatpush2.msra.mxu0 0.0
    %276 = vmatprep.subr.mxu0 0.0
    %277 = vmatpush2.msra.mxu0 0.0
    %278 = vmatprep.subr.mxu0 0.0
    %279 = vmatpush2.msra.mxu0 0.0
    %280 = vmatprep.subr.mxu0 0.0
    %281 = vmatpush2.msra.mxu0 0.0
    %282 = vmatprep.subr.mxu0 0.0
    %283 = vmatpush2.msra.mxu0 0.0
    %284 = vmatprep.mubr.f32.mxu0 0.0
    %285 = vmatmul.mubr.f32.gmra.mxu0 %v218
    %v286 = vpop.f32.mrf.mxu0
    %v287 = vadd.f32 0.0, %v286
    %v288 = vpop.f32.mrf.mxu0
    %289 = vdwg.mxu0
    %v290 = vsel %vm141, %v287, 0.0
    %291 = vadd.xlane.f32.xlu0 %v290
    %v292 = vpop.xlane.xlu0 %291
    %v293 = vmul.f32 %v292, 0.03125
    %v294 = vmul.f32 %v287, %v287
    %v295 = vsel %vm141, %v294, 0.0
    %296 = vadd.xlane.f32.xlu0 %v295
    %v297 = vpop.xlane.xlu0 %296
    %v298 = vmul.f32 %v297, 0.03125
    %v299 = vmul.f32 %v293, %v293
    %v300 = vsub.f32 %v298, %v299
    %v301 = vadd.f32 %v300, 1e-05
    %v302 = vrsqrt.pop %v301
    %v303 = vld [vmem:[%s6] sm:$0xff]
    %v304 = vmul.f32 %v302, %v303
    %v305 = vld [vmem:[%s7] sm:$0xff]
    %v306 = vmul.f32 %v293, %v304
    %v307 = vsub.f32 %v305, %v306
    %309 = vset.pattern.permute.xlu0 0
    %310 = vperm.xlu0 %309, %v304
    %v311 = vpop.permute.xlu0 %310
    %314 = vset.pattern.permute.xlu0 0
    %315 = vperm.xlu0 %314, %v307
    %v316 = vpop.permute.xlu0 %315
    %v318 = vmul.f32 %v287, %v311
    %v319 = vadd.f32 %v318, %v316
    %v320 = vld [vmem:[%s1] sm:$0xff]
    %v321 = vadd.f32 %v319, %v320
    %vm322 = vcmp.gt.f32.partialorder %v321, 0.0
    %v323 = vmul.f32 %v321, 1.442695
    %v324 = vpow.pop %v323
    %v325 = vsub.f32 %v324, 1.0
    %v326 = vsel %vm322, %v321, %v325
    %327 = vst.msk [vmem:[#allocation6] sm:$0xff] %vm49, %v326
    %s328 = scalar_lea.vmem %s1, 8
    %v329 = vld [vmem:[%s328] sm:$0xff]
    %331 = vrot.lane.b32.xlu0 %v329, 16
    %v332 = vpop.permute.xlu0 %331
    %v334 = vadd.f32 %v319, %v332
    %vm335 = vcmp.gt.f32.partialorder %v334, 0.0
    %v336 = vmul.f32 %v334, 1.442695
    %v337 = vpow.pop %v336
    %v338 = vsub.f32 %v337, 1.0
    %v339 = vsel %vm335, %v334, %v338
    %341 = vrot.lane.b32.xlu0 %v339, 112
    %v342 = vpop.permute.xlu0 %341
    %s344 = scalar_lea.vmem [#allocation6], 8
    %345 = vst.msk [vmem:[%s344] sm:$0xff] %vm49, %v342
    // Predicated region
    $region38: #{tpu_custom_call.1} parent=1 // pred_check
      _
    $region39: #{tpu_custom_call.1} parent=1 // pred_check_branch
      %347 = sbr.rel (0) target = $region41
    $region40: #{tpu_custom_call.1} parent=1 // pred_region
      %s349 = ssub.s32 256, 256
      %350 = vsyncadd [#allocation5], %s349
      %s351 = sshll.u32 [#allocation6], 4
      %s352 = int_to_ptr.vmem [resolvable:$true] %s351
      %357 = dma.vmem_to_hbm [thread:$0]  %s352, 256, %s8, [#allocation5], 128, 128, 8
    $region41: #{tpu_custom_call.1} parent=1 // pred_fallthru
      _
    // Predicated region
    $region42: #{tpu_custom_call.1} parent=1 // pred_check
      _
    $region43: #{tpu_custom_call.1} parent=1 // pred_check_branch
      %359 = sbr.rel (0) target = $region45
    $region44: #{tpu_custom_call.1} parent=1 // pred_region
      %360 = dma.done [#allocation5], 256
    $region45: #{tpu_custom_call.1} parent=1 // pred_fallthru
      _
    %361 = vsyncpa [#allocation4], 1
    %362 = vsyncpa [#allocation5], 1

</llo_original>
